<compile_context>
chip_gen: v7x
topology: tpu7x:2x2x1
jax: 0.10.0
libtpu: 0.0.40
codegen_flags: <defaults>
</compile_context>

<pallas_src>
import math

import jax
import jax.numpy as jnp
from jax.experimental import pallas as pl
from jax.experimental.pallas import tpu as pltpu


_MAX_LANE_TILE = 32768  # lanes per spatial tile; ~6 MiB double-buffered VMEM


# ---------------------------------------------------------------------------
# Fused kernel: normalize + 1x1-conv backbone (+ ReLU), two outputs.
# ---------------------------------------------------------------------------
def _fused_backbone_kernel(x_ref, w_ref, b_ref, inv_std_ref, shift_ref,
                           norm_ref, feat_ref):
    # x_ref    : (C,   T)  raw pixel tile (lane axis = spatial)
    # w_ref    : (Cout, C) 1x1-conv weights
    # b_ref    : (Cout, 1) bias
    # inv_std  : (C,   1)  1 / pixel_std
    # shift    : (C,   1)  pixel_mean / pixel_std
    # norm_ref : (C,   T)  normalized-image output tile
    # feat_ref : (Cout, T) backbone feature output tile
    x_norm = x_ref[...] * inv_std_ref[...] - shift_ref[...]   # 1 FMA / elem
    norm_ref[...] = x_norm.astype(norm_ref.dtype)

    # K = C contraction on the MXU (vector-extended slot; VPU/XLU stay free).
    y = jnp.dot(w_ref[...], x_norm, preferred_element_type=jnp.float32)
    feat_ref[...] = jnp.maximum(y + b_ref[...], 0.0).astype(feat_ref.dtype)


def preprocess_and_backbone(images, pixel_mean, pixel_std, w, b,
                            feature_dtype=jnp.float32):
    """Fused (x - mean)/std normalization + 1x1-conv + ReLU backbone.

    images : (N, C, H, W) float32   (NCHW, like PyTorch)
    w      : (Cout, C)    float32
    b      : (Cout,)      float32
    Returns (normalized_images (N,C,H,W), features (N,Cout,H,W)).
    """
    N, C, H, W = images.shape
    Cout = w.shape[0]
    HW = H * W

    # Lane tile: multiple of 128, capped; tail block is padded/masked by
    # Pallas via the cdiv grid (no divisibility requirement on HW).
    hw_padded = ((HW + 127) // 128) * 128
    T = min(_MAX_LANE_TILE, hw_padded)
    grid = (N, (HW + T - 1) // T)

    x3d = images.reshape(N, C, HW)                          # free, contiguous
    inv_std = (1.0 / pixel_std).reshape(C, 1).astype(jnp.float32)
    shift = (pixel_mean.reshape(C, 1) * inv_std).astype(jnp.float32)
    b2d = b.reshape(Cout, 1).astype(jnp.float32)

    norm3d, feat3d = pl.pallas_call(
        _fused_backbone_kernel,
        out_shape=(
            jax.ShapeDtypeStruct((N, C, HW), jnp.float32),
            jax.ShapeDtypeStruct((N, Cout, HW), feature_dtype),
        ),
        grid=grid,
        in_specs=[
            # (None, C, T): batch dim squeezed, spatial tiled on lanes.
            pl.BlockSpec((None, C, T), lambda n, t: (n, 0, t)),
            pl.BlockSpec((Cout, C), lambda n, t: (0, 0)),
            pl.BlockSpec((Cout, 1), lambda n, t: (0, 0)),
            pl.BlockSpec((C, 1), lambda n, t: (0, 0)),
            pl.BlockSpec((C, 1), lambda n, t: (0, 0)),
        ],
        out_specs=(
            pl.BlockSpec((None, C, T), lambda n, t: (n, 0, t)),
            pl.BlockSpec((None, Cout, T), lambda n, t: (n, 0, t)),
        ),
        compiler_params=pltpu.CompilerParams(
            dimension_semantics=("parallel", "parallel"),
        ),
    )(x3d, w.astype(jnp.float32), b2d, inv_std, shift)

    return norm3d.reshape(N, C, H, W), feat3d.reshape(N, Cout, H, W)


# ---------------------------------------------------------------------------
# Proposals: tiny (P=36 boxes) -> plain jnp, no kernel needed.
# ---------------------------------------------------------------------------
def box_cxcywh_to_xyxy(x):
    cx, cy, w, h = x[..., 0], x[..., 1], x[..., 2], x[..., 3]
    return jnp.stack(
        [cx - 0.5 * w, cy - 0.5 * h, cx + 0.5 * w, cy + 0.5 * h], axis=-1)


def make_proposals(init_proposal_boxes, image_whwh):
    # init_proposal_boxes: (P, 4) cxcywh in [0,1];  image_whwh: (N, 4)
    xyxy = box_cxcywh_to_xyxy(init_proposal_boxes)            # (P, 4)
    boxes = xyxy[None, :, :] * image_whwh[:, None, :]         # (N, P, 4)
    logits = jnp.full(
        (image_whwh.shape[0], init_proposal_boxes.shape[0]), 0.001, jnp.float32)
    return boxes, logits


# ---------------------------------------------------------------------------
# Buffer construction (mirrors __init__)
# ---------------------------------------------------------------------------
def build_init_proposal_boxes(num_proposals):
    proposal_num_root = int((num_proposals / 9) ** 0.5)
    xx = [1 / proposal_num_root * i + 0.5 / proposal_num_root
          for i in range(proposal_num_root)]
    yy = [1 / proposal_num_root * i + 0.5 / proposal_num_root
          for i in range(proposal_num_root)]
    xy = [[x, y] for x in xx for y in yy]
    sizes = [1 / 4, 2 / 4, 3 / 4]
    aspect_ratios = [0.5, 1, 2]
    boxes = []
    for size in sizes:
        area = size ** 2.0
        for ar in aspect_ratios:
            w = math.sqrt(area / ar)
            h = ar * w
            for _xy in xy:
                boxes.append([_xy[0], _xy[1], w, h])
    return jnp.asarray(boxes, dtype=jnp.float32)


def generalized_rcnn_wsl_inference(images, params):
    """Mirror of _GeneralizedRCNNWSL.inference (pre-roi_heads)."""
    N, C, H, W = images.shape
    x_norm, features = preprocess_and_backbone(
        images, params["pixel_mean"], params["pixel_std"],
        params["backbone_w"], params["backbone_b"])

    # image_whwh = [W, H, W, H] per image (from x['image'].shape[1:]).
    whwh = jnp.broadcast_to(
        jnp.array([W, H, W, H], dtype=jnp.float32)[None, :], (N, 4))
    proposal_boxes, objectness_logits = make_proposals(
        params["init_proposal_boxes"], whwh)

    # TODO(synk): roi_heads, proposal_generator.get_losses, detector_postprocess
    # and ImageList.from_tensors size-divisibility padding are injected /
    # external components with no definition in this module; the real
    # backbone is likewise injected and stood in for by the 1x1-conv + ReLU.
    return {
        "normalized_images": x_norm,
        "features": features,
        "proposal_boxes": proposal_boxes,
        "objectness_logits": objectness_logits,
    }


if __name__ == "__main__":
    key = jax.random.PRNGKey(0)
    k_img, k_w = jax.random.split(key, 2)

    N, C, H, W = 2, 3, 16, 16
    Cout = 8
    num_proposals = 36  # 9 * 2^2, matches the __init__ construction

    images = jax.random.uniform(k_img, (N, C, H, W), jnp.float32, 0.0, 255.0)

    params = {
        "pixel_mean": jnp.array([103.53, 116.28, 123.675], dtype=jnp.float32),
        "pixel_std": jnp.array([57.375, 57.12, 58.395], dtype=jnp.float32),
        "backbone_w": (0.1 * jax.random.normal(k_w, (Cout, C))).astype(jnp.float32),
        "backbone_b": jnp.zeros((Cout,), dtype=jnp.float32),
        "init_proposal_boxes": build_init_proposal_boxes(num_proposals),
    }

    out = generalized_rcnn_wsl_inference(images, params)
    jax.block_until_ready(out)

    # Pure-JAX reference check.
    mean = params["pixel_mean"].reshape(1, C, 1, 1)
    std = params["pixel_std"].reshape(1, C, 1, 1)
    norm_ref = (images - mean) / std
    feat_ref = jnp.maximum(
        jnp.einsum("oc,nchw->nohw", params["backbone_w"], norm_ref)
        + params["backbone_b"].reshape(1, Cout, 1, 1), 0.0)

    assert out["normalized_images"].shape == (N, C, H, W)
    assert out["features"].shape == (N, Cout, H, W)
    assert out["proposal_boxes"].shape == (N, num_proposals, 4)
    assert out["objectness_logits"].shape == (N, num_proposals)
    assert jnp.allclose(out["normalized_images"], norm_ref, atol=1e-3, rtol=1e-3)
    assert jnp.allclose(out["features"], feat_ref, atol=1e-3, rtol=1e-3)
    print("KERNEL_OK")
</pallas_src>

<mosaic_0001>
module attributes {stable_mosaic.version = 11 : i64} {
  func.func @_fused_backbone_kernel(%arg0: i32, %arg1: i32, %arg2: memref<1x3x256xf32, #tpu.memory_space<vmem>>, %arg3: memref<8x3xf32, #tpu.memory_space<vmem>>, %arg4: memref<8x1xf32, #tpu.memory_space<vmem>>, %arg5: memref<3x1xf32, #tpu.memory_space<vmem>>, %arg6: memref<3x1xf32, #tpu.memory_space<vmem>>, %arg7: memref<1x3x256xf32, #tpu.memory_space<vmem>>, %arg8: memref<1x8x256xf32, #tpu.memory_space<vmem>>) attributes {dimension_semantics = [#tpu.dimension_semantics<parallel>, #tpu.dimension_semantics<parallel>], iteration_bounds = array<i64: 2, 1>, scalar_prefetch = 0 : i64, scratch_operands = 0 : i64, tpu.core_type = #tpu.core_type<tc>, window_params = [{transform_indices = @transform_0, window_bounds = array<i64: 1, 3, 256>}, {pipeline_mode = #tpu.pipeline_mode<synchronous>, transform_indices = @transform_1, window_bounds = array<i64: 8, 3>}, {pipeline_mode = #tpu.pipeline_mode<synchronous>, transform_indices = @transform_2, window_bounds = array<i64: 8, 1>}, {pipeline_mode = #tpu.pipeline_mode<synchronous>, transform_indices = @transform_3, window_bounds = array<i64: 3, 1>}, {pipeline_mode = #tpu.pipeline_mode<synchronous>, transform_indices = @transform_4, window_bounds = array<i64: 3, 1>}, {transform_indices = @transform_5, window_bounds = array<i64: 1, 3, 256>}, {transform_indices = @transform_6, window_bounds = array<i64: 1, 8, 256>}]} {
    %c0 = arith.constant 0 : index
    %c0_0 = arith.constant 0 : index
    %c0_1 = arith.constant 0 : index
    %0 = vector.load %arg2[%c0, %c0_0, %c0_1] : memref<1x3x256xf32, #tpu.memory_space<vmem>>, vector<1x3x256xf32>
    %1 = vector.shape_cast %0 : vector<1x3x256xf32> to vector<3x256xf32>
    %c0_2 = arith.constant 0 : index
    %c0_3 = arith.constant 0 : index
    %2 = vector.load %arg5[%c0_2, %c0_3] : memref<3x1xf32, #tpu.memory_space<vmem>>, vector<3x1xf32>
    %3 = vector.broadcast %2 : vector<3x1xf32> to vector<3x256xf32>
    %4 = arith.mulf %1, %3 : vector<3x256xf32>
    %c0_4 = arith.constant 0 : index
    %c0_5 = arith.constant 0 : index
    %5 = vector.load %arg6[%c0_4, %c0_5] : memref<3x1xf32, #tpu.memory_space<vmem>>, vector<3x1xf32>
    %6 = vector.broadcast %5 : vector<3x1xf32> to vector<3x256xf32>
    %7 = arith.subf %4, %6 : vector<3x256xf32>
    %c0_6 = arith.constant 0 : index
    %c0_7 = arith.constant 0 : index
    %c0_8 = arith.constant 0 : index
    %8 = vector.load %arg7[%c0_6, %c0_7, %c0_8] : memref<1x3x256xf32, #tpu.memory_space<vmem>>, vector<1x3x256xf32>
    %9 = vector.shape_cast %8 : vector<1x3x256xf32> to vector<3x256xf32>
    %10 = vector.shape_cast %7 : vector<3x256xf32> to vector<1x3x256xf32>
    tpu.vector_store %arg7[%c0_6, %c0_7, %c0_8], %10 {strides = array<i32>} : memref<1x3x256xf32, #tpu.memory_space<vmem>>, vector<1x3x256xf32>,
    %c0_9 = arith.constant 0 : index
    %c0_10 = arith.constant 0 : index
    %11 = vector.load %arg3[%c0_9, %c0_10] : memref<8x3xf32, #tpu.memory_space<vmem>>, vector<8x3xf32>
    %cst = arith.constant dense<0.000000e+00> : vector<8x256xf32>
    %12 = tpu.matmul %11, %7, %cst {dimension_numbers = #tpu.dot_dimension_numbers<[1], [0], [0], [1], [0, 0, 1, 1], [], []>} : vector<8x3xf32>, vector<3x256xf32>, vector<8x256xf32> -> vector<8x256xf32>
    %c0_11 = arith.constant 0 : index
    %c0_12 = arith.constant 0 : index
    %13 = vector.load %arg4[%c0_11, %c0_12] : memref<8x1xf32, #tpu.memory_space<vmem>>, vector<8x1xf32>
    %14 = vector.broadcast %13 : vector<8x1xf32> to vector<8x256xf32>
    %15 = arith.addf %12, %14 : vector<8x256xf32>
    %cst_13 = arith.constant 0.000000e+00 : f32
    %16 = vector.broadcast %cst_13 : f32 to vector<8x256xf32>
    %17 = arith.maximumf %15, %16 : vector<8x256xf32>
    %c0_14 = arith.constant 0 : index
    %c0_15 = arith.constant 0 : index
    %c0_16 = arith.constant 0 : index
    %18 = vector.load %arg8[%c0_14, %c0_15, %c0_16] : memref<1x8x256xf32, #tpu.memory_space<vmem>>, vector<1x8x256xf32>
    %19 = vector.shape_cast %18 : vector<1x8x256xf32> to vector<8x256xf32>
    %20 = vector.shape_cast %17 : vector<8x256xf32> to vector<1x8x256xf32>
    tpu.vector_store %arg8[%c0_14, %c0_15, %c0_16], %20 {strides = array<i32>} : memref<1x8x256xf32, #tpu.memory_space<vmem>>, vector<1x8x256xf32>,
    return
  }
  func.func @transform_0(%arg0: i32, %arg1: i32) -> (i32, i32, i32) {
    %c0_i32 = arith.constant 0 : i32
    %c0_i32_0 = arith.constant 0 : i32
    return %arg0, %c0_i32, %arg1 : i32, i32, i32
  }
  func.func @transform_1(%arg0: i32, %arg1: i32) -> (i32, i32) {
    %c0_i32 = arith.constant 0 : i32
    %c0_i32_0 = arith.constant 0 : i32
    %c0_i32_1 = arith.constant 0 : i32
    return %c0_i32, %c0_i32_0 : i32, i32
  }
  func.func @transform_2(%arg0: i32, %arg1: i32) -> (i32, i32) {
    %c0_i32 = arith.constant 0 : i32
    %c0_i32_0 = arith.constant 0 : i32
    %c0_i32_1 = arith.constant 0 : i32
    return %c0_i32, %c0_i32_0 : i32, i32
  }
  func.func @transform_3(%arg0: i32, %arg1: i32) -> (i32, i32) {
    %c0_i32 = arith.constant 0 : i32
    %c0_i32_0 = arith.constant 0 : i32
    %c0_i32_1 = arith.constant 0 : i32
    return %c0_i32, %c0_i32_0 : i32, i32
  }
  func.func @transform_4(%arg0: i32, %arg1: i32) -> (i32, i32) {
    %c0_i32 = arith.constant 0 : i32
    %c0_i32_0 = arith.constant 0 : i32
    %c0_i32_1 = arith.constant 0 : i32
    return %c0_i32, %c0_i32_0 : i32, i32
  }
  func.func @transform_5(%arg0: i32, %arg1: i32) -> (i32, i32, i32) {
    %c0_i32 = arith.constant 0 : i32
    %c0_i32_0 = arith.constant 0 : i32
    return %arg0, %c0_i32, %arg1 : i32, i32, i32
  }
  func.func @transform_6(%arg0: i32, %arg1: i32) -> (i32, i32, i32) {
    %c0_i32 = arith.constant 0 : i32
    %c0_i32_0 = arith.constant 0 : i32
    return %arg0, %c0_i32, %arg1 : i32, i32, i32
  }
}

</mosaic_0001>

<llo_original>
// kernel: tpu_custom_call.1
$region0: #{tpu_custom_call.1}
  #allocation0 [shape = 'u32[]', space=smem, size = 0x4, offset = 0x4, fixed_abs, tag = 'smem constant byte address 0x4 - core index']
  #allocation1 [shape = 'u32[144,128]{1,0:T(1,128)}', space=vmem, size = 0x12000, scoped, tag = 'internal scratch']
  %s0 = inlined_call_operand.vmem [shape: f32[2,3,256], index: 0, kind: input, shape index: {}]
  %s1 = inlined_call_operand.vmem [shape: f32[8,3], index: 1, kind: input, shape index: {}]
  %s2 = inlined_call_operand.vmem [shape: f32[8,1], index: 2, kind: input, shape index: {}]
  %s3 = inlined_call_operand.vmem [shape: f32[3,1], index: 3, kind: input, shape index: {}]
  %s4 = inlined_call_operand.vmem [shape: f32[3,1], index: 4, kind: input, shape index: {}]
  %s5 = inlined_call_operand.vmem [shape: f32[2,3,256], index: 5, kind: output, shape index: {0}]
  %s6 = inlined_call_operand.hbm [shape: f32[2,8,256], index: 6, kind: output, shape index: {1}]
  %7 = xla_tuple %s5, %s6
  %s8 = sld [smem:[#allocation0]]
  $region61: #{tpu_custom_call.1} parent=0
    _
  %s10 = ssub.s32 1, %s8
  %s11 = scalar_select 0, %s10, %s8
  $region1: #{tpu_custom_call.1} parent=0
    #allocation2 [shape = 'u8[16384]{0}', space=vmem, size = 0x4000, scoped, tag = 'output window, operand 1']
    #allocation3 [shape = 's32[2]{0}', space=sflag, size = 0x8, scoped, tag = 'scoped memory for tpu_custom_call.1']
    %12 = vsyncpa [#allocation3], 0
    %s13 = scalar_lea.sflag [#allocation3], 1
    %14 = vsyncpa %s13, 0
    loop: start=0, step=1, limit=4
    $region2: #{tpu_custom_call.1} parent=1 // loop_pre_header
      _
    $region3: #{tpu_custom_call.1} parent=1 // loop_header
      %s16 = sphi 0, %s20
      %p17 = scmp.ge.s32.totalorder %s16, 4
      %s23 = sphi 0, %s35
      %s24 = sphi 0, %s31
      %s25 = sphi 0, %s23
      %s26 = sphi 0, %s24
      %s27 = sphi 0, %s25
      %s28 = sphi 0, %s26
      %s40 = sphi 0, %s42
      %s43 = sphi 0, %s40
      %s44 = sphi 0, %s43
      %s60 = sphi 0, %s44
      %s64 = sphi 0, %s64
      %s66 = sphi 0, %s64
      %s67 = sphi 0, %s66
      %s81 = sphi 0, %s67
      %s85 = sphi 0, %s85
      %s87 = sphi 0, %s85
      %s88 = sphi 0, %s87
      %s102 = sphi 0, %s88
      %s106 = sphi 0, %s106
      %s108 = sphi 0, %s106
      %s109 = sphi 0, %s108
      %s123 = sphi 0, %s109
      %s127 = sphi 0, %s127
      %s129 = sphi 0, %s127
      %s130 = sphi 0, %s129
      %s144 = sphi 0, %s130
      %s152 = sphi 0, %s154
      %s155 = sphi 0, %s152
      %s156 = sphi 0, %s155
      %s172 = sphi 0, %s156
      %s180 = sphi 0, %s182
      %s183 = sphi 0, %s180
      %s184 = sphi 0, %s183
      %s200 = sphi 0, %s184
    $region4: #{tpu_custom_call.1} parent=1 // loop_header_branch
      %19 = sbr.rel (%p17) target = $region8
    $region5: #{tpu_custom_call.1} parent=1 // loop_body
      %s21 = ssub.s32 %s16, 1
      %s22 = ssub.s32 %s16, 2
      %s29 = sadd.s32 1, %s24
      %p30 = scmp.ge.s32.totalorder %s29, 1
      %s31 = scalar_select %p30, 0, %s29
      %s32 = sadd.s32 1, %s23
      %s33 = scalar_select %p30, %s32, %s23
      %p34 = scmp.ge.s32.totalorder %s33, 2
      %s35 = scalar_select %p34, 0, %s33
      %s36 = ssub.s32 %s23, %s35
      %s37 = ssub.s32 %s24, %s31
      %s38 = sor.u32 %s36, %s37
      %p39 = scmp.eq.s32.totalorder %s38, 0
      %s41 = sadd.s32 %s40, 1
      %s42 = scalar_select %p39, %s40, %s41
      %p45 = pneg %p39
      %p46 = scmp.eq.s32.totalorder %s16, 1
      %p47 = por %p45, %p46
      %p48 = scmp.ne.s32.totalorder %s40, %s43
      %p49 = scmp.eq.s32.totalorder %s16, 0
      %p50 = por %p48, %p49
      %p51 = scmp.ne.s32.totalorder %s40, %s43
      %p52 = scmp.eq.s32.totalorder %s21, 1
      %p53 = por %p51, %p52
      %p54 = scmp.ne.s32.totalorder %s43, %s44
      %p55 = scmp.eq.s32.totalorder %s21, 0
      %p56 = por %p54, %p55
      %p57 = scmp.ne.s32.totalorder %s43, %s44
      %p58 = scmp.eq.s32.totalorder %s22, 1
      %p59 = por %p57, %p58
      %p61 = scmp.ne.s32.totalorder %s44, %s60
      %p62 = scmp.eq.s32.totalorder %s22, 0
      %p63 = por %p61, %p62
      %s65 = sadd.s32 %s64, 1
      %p68 = scmp.eq.s32.totalorder %s16, 1
      %p69 = scmp.ne.s32.totalorder %s64, %s66
      %p70 = scmp.eq.s32.totalorder %s16, 0
      %p71 = por %p69, %p70
      %p72 = scmp.ne.s32.totalorder %s64, %s66
      %p73 = scmp.eq.s32.totalorder %s21, 1
      %p74 = por %p72, %p73
      %p75 = scmp.ne.s32.totalorder %s66, %s67
      %p76 = scmp.eq.s32.totalorder %s21, 0
      %p77 = por %p75, %p76
      %p78 = scmp.ne.s32.totalorder %s66, %s67
      %p79 = scmp.eq.s32.totalorder %s22, 1
      %p80 = por %p78, %p79
      %p82 = scmp.ne.s32.totalorder %s67, %s81
      %p83 = scmp.eq.s32.totalorder %s22, 0
      %p84 = por %p82, %p83
      %s86 = sadd.s32 %s85, 1
      %p89 = scmp.eq.s32.totalorder %s16, 1
      %p90 = scmp.ne.s32.totalorder %s85, %s87
      %p91 = scmp.eq.s32.totalorder %s16, 0
      %p92 = por %p90, %p91
      %p93 = scmp.ne.s32.totalorder %s85, %s87
      %p94 = scmp.eq.s32.totalorder %s21, 1
      %p95 = por %p93, %p94
      %p96 = scmp.ne.s32.totalorder %s87, %s88
      %p97 = scmp.eq.s32.totalorder %s21, 0
      %p98 = por %p96, %p97
      %p99 = scmp.ne.s32.totalorder %s87, %s88
      %p100 = scmp.eq.s32.totalorder %s22, 1
      %p101 = por %p99, %p100
      %p103 = scmp.ne.s32.totalorder %s88, %s102
      %p104 = scmp.eq.s32.totalorder %s22, 0
      %p105 = por %p103, %p104
      %s107 = sadd.s32 %s106, 1
      %p110 = scmp.eq.s32.totalorder %s16, 1
      %p111 = scmp.ne.s32.totalorder %s106, %s108
      %p112 = scmp.eq.s32.totalorder %s16, 0
      %p113 = por %p111, %p112
      %p114 = scmp.ne.s32.totalorder %s106, %s108
      %p115 = scmp.eq.s32.totalorder %s21, 1
      %p116 = por %p114, %p115
      %p117 = scmp.ne.s32.totalorder %s108, %s109
      %p118 = scmp.eq.s32.totalorder %s21, 0
      %p119 = por %p117, %p118
      %p120 = scmp.ne.s32.totalorder %s108, %s109
      %p121 = scmp.eq.s32.totalorder %s22, 1
      %p122 = por %p120, %p121
      %p124 = scmp.ne.s32.totalorder %s109, %s123
      %p125 = scmp.eq.s32.totalorder %s22, 0
      %p126 = por %p124, %p125
      %s128 = sadd.s32 %s127, 1
      %p131 = scmp.eq.s32.totalorder %s16, 1
      %p132 = scmp.ne.s32.totalorder %s127, %s129
      %p133 = scmp.eq.s32.totalorder %s16, 0
      %p134 = por %p132, %p133
      %p135 = scmp.ne.s32.totalorder %s127, %s129
      %p136 = scmp.eq.s32.totalorder %s21, 1
      %p137 = por %p135, %p136
      %p138 = scmp.ne.s32.totalorder %s129, %s130
      %p139 = scmp.eq.s32.totalorder %s21, 0
      %p140 = por %p138, %p139
      %p141 = scmp.ne.s32.totalorder %s129, %s130
      %p142 = scmp.eq.s32.totalorder %s22, 1
      %p143 = por %p141, %p142
      %p145 = scmp.ne.s32.totalorder %s130, %s144
      %p146 = scmp.eq.s32.totalorder %s22, 0
      %p147 = por %p145, %p146
      %s148 = ssub.s32 %s23, %s35
      %s149 = ssub.s32 %s24, %s31
      %s150 = sor.u32 %s148, %s149
      %p151 = scmp.eq.s32.totalorder %s150, 0
      %s153 = sadd.s32 %s152, 1
      %s154 = scalar_select %p151, %s152, %s153
      %p157 = pneg %p151
      %p158 = scmp.eq.s32.totalorder %s16, 1
      %p159 = por %p157, %p158
      %p160 = scmp.ne.s32.totalorder %s152, %s155
      %p161 = scmp.eq.s32.totalorder %s16, 0
      %p162 = por %p160, %p161
      %p163 = scmp.ne.s32.totalorder %s152, %s155
      %p164 = scmp.eq.s32.totalorder %s21, 1
      %p165 = por %p163, %p164
      %p166 = scmp.ne.s32.totalorder %s155, %s156
      %p167 = scmp.eq.s32.totalorder %s21, 0
      %p168 = por %p166, %p167
      %p169 = scmp.ne.s32.totalorder %s155, %s156
      %p170 = scmp.eq.s32.totalorder %s22, 1
      %p171 = por %p169, %p170
      %p173 = scmp.ne.s32.totalorder %s156, %s172
      %p174 = scmp.eq.s32.totalorder %s22, 0
      %p175 = por %p173, %p174
      %s176 = ssub.s32 %s23, %s35
      %s177 = ssub.s32 %s24, %s31
      %s178 = sor.u32 %s176, %s177
      %p179 = scmp.eq.s32.totalorder %s178, 0
      %s181 = sadd.s32 %s180, 1
      %s182 = scalar_select %p179, %s180, %s181
      %p185 = pneg %p179
      %p186 = scmp.eq.s32.totalorder %s16, 1
      %p187 = por %p185, %p186
      %p188 = scmp.ne.s32.totalorder %s180, %s183
      %p189 = scmp.eq.s32.totalorder %s16, 0
      %p190 = por %p188, %p189
      %p191 = scmp.ne.s32.totalorder %s180, %s183
      %p192 = scmp.eq.s32.totalorder %s21, 1
      %p193 = por %p191, %p192
      %p194 = scmp.ne.s32.totalorder %s183, %s184
      %p195 = scmp.eq.s32.totalorder %s21, 0
      %p196 = por %p194, %p195
      %p197 = scmp.ne.s32.totalorder %s183, %s184
      %p198 = scmp.eq.s32.totalorder %s22, 1
      %p199 = por %p197, %p198
      %p201 = scmp.ne.s32.totalorder %s184, %s200
      %p202 = scmp.eq.s32.totalorder %s22, 0
      %p203 = por %p201, %p202
      %p204 = scmp.le.s32.totalorder 1, %s16
      %p205 = scmp.lt.s32.totalorder %s16, 3
      %p206 = pnand %p204, %p205
      %p207 = pneg %p206
      // Predicated region
      $region9: #{tpu_custom_call.1} parent=5 // pred_check
        _
      $region10: #{tpu_custom_call.1} parent=5 // pred_check_branch
        %209 = sbr.rel (%p206) target = $region12
      $region11: #{tpu_custom_call.1} parent=5 // pred_region
        %s210 = ssub.s32 %s16, 1
        // Predicated region
        $region13: #{tpu_custom_call.1} parent=11 // pred_check
          %p211 = pneg %p77
        $region14: #{tpu_custom_call.1} parent=11 // pred_check_branch
          %213 = sbr.rel (%p211) target = $region16
        $region15: #{tpu_custom_call.1} parent=11 // pred_region
          _
        $region16: #{tpu_custom_call.1} parent=11 // pred_fallthru
          _
        // Predicated region
        $region17: #{tpu_custom_call.1} parent=11 // pred_check
          %p214 = pneg %p98
        $region18: #{tpu_custom_call.1} parent=11 // pred_check_branch
          %216 = sbr.rel (%p214) target = $region20
        $region19: #{tpu_custom_call.1} parent=11 // pred_region
          _
        $region20: #{tpu_custom_call.1} parent=11 // pred_fallthru
          _
        // Predicated region
        $region21: #{tpu_custom_call.1} parent=11 // pred_check
          %p217 = pneg %p119
        $region22: #{tpu_custom_call.1} parent=11 // pred_check_branch
          %219 = sbr.rel (%p217) target = $region24
        $region23: #{tpu_custom_call.1} parent=11 // pred_region
          _
        $region24: #{tpu_custom_call.1} parent=11 // pred_fallthru
          _
        // Predicated region
        $region25: #{tpu_custom_call.1} parent=11 // pred_check
          %p220 = pneg %p140
        $region26: #{tpu_custom_call.1} parent=11 // pred_check_branch
          %222 = sbr.rel (%p220) target = $region28
        $region27: #{tpu_custom_call.1} parent=11 // pred_region
          _
        $region28: #{tpu_custom_call.1} parent=11 // pred_fallthru
          _
      $region12: #{tpu_custom_call.1} parent=5 // pred_fallthru
        _
      %p223 = scmp.lt.s32.totalorder %s16, 2
      // Predicated region
      $region29: #{tpu_custom_call.1} parent=5 // pred_check
        %p224 = pneg %p223
      $region30: #{tpu_custom_call.1} parent=5 // pred_check_branch
        %226 = sbr.rel (%p224) target = $region32
      $region31: #{tpu_custom_call.1} parent=5 // pred_region
        // Predicated region
        $region33: #{tpu_custom_call.1} parent=31 // pred_check
          %p227 = pneg %p50
        $region34: #{tpu_custom_call.1} parent=31 // pred_check_branch
          %229 = sbr.rel (%p227) target = $region36
        $region35: #{tpu_custom_call.1} parent=31 // pred_region
          %s230 = smul.u32 2, %s24
          %p231 = scmp.lt.s32.totalorder %s23, 1
          %s232 = scalar_select %p231, %s23, 1
          %p233 = scmp.lt.s32.totalorder %s230, 1
          %s234 = scalar_select %p233, %s230, 1
          %s235 = smul.addr %s232, 2
          %s236 = sadd.s32 %s234, %s235
          %s237 = smul.addr %s236, 4
          %s238 = scalar_lea.vmem %s0, %s237
          %s239 = smul.u32 2, %s24
        $region36: #{tpu_custom_call.1} parent=31 // pred_fallthru
          _
      $region32: #{tpu_custom_call.1} parent=5 // pred_fallthru
        _
      %p240 = scmp.le.s32.totalorder 1, %s16
      %p241 = scmp.lt.s32.totalorder %s16, 3
      %p242 = pnand %p240, %p241
      %p243 = pneg %p242
      // Predicated region
      $region37: #{tpu_custom_call.1} parent=5 // pred_check
        _
      $region38: #{tpu_custom_call.1} parent=5 // pred_check_branch
        %245 = sbr.rel (%p242) target = $region40
      $region39: #{tpu_custom_call.1} parent=5 // pred_region
        %s246 = ssub.s32 %s16, 1
        %s247 = smul.u32 2, %s26
        %p248 = scmp.lt.s32.totalorder %s25, 1
        %s249 = scalar_select %p248, %s25, 1
        %p250 = scmp.lt.s32.totalorder %s247, 1
        %s251 = scalar_select %p250, %s247, 1
        %s252 = smul.addr %s249, 2
        %s253 = sadd.s32 %s251, %s252
        %s254 = smul.addr %s253, 4
        %s255 = scalar_lea.vmem %s0, %s254
        %p256 = pneg %p56
        %p257 = pneg %p53
        %p258 = pneg %p77
        %p259 = pneg %p74
        %p260 = pneg %p98
        %p261 = pneg %p95
        %p262 = pneg %p119
        %p263 = pneg %p116
        %p264 = pneg %p140
        %p265 = pneg %p137
        %p266 = pneg %p168
        %p267 = pneg %p165
        %s268 = smul.u32 2, %s26
        %p269 = scmp.lt.s32.totalorder %s25, 1
        %s270 = scalar_select %p269, %s25, 1
        %p271 = scmp.lt.s32.totalorder %s268, 1
        %s272 = scalar_select %p271, %s268, 1
        %s273 = smul.addr %s270, 2
        %s274 = sadd.s32 %s272, %s273
        %s275 = smul.addr %s274, 4
        %s276 = scalar_lea.vmem %s5, %s275
        %p277 = pneg %p196
        %p278 = pneg %p193
        %s279 = sand.u32 %s183, 1
        %s280 = scalar_lea.sflag [#allocation3], %s279
        %s281 = sand.u32 %s183, 1
        %s282 = smul.addr %s281, 16
        %s283 = scalar_lea.vmem [#allocation2], %s282
        %s284 = smul.u32 2, %s26
        %p285 = scmp.lt.s32.totalorder %s25, 1
        %s286 = scalar_select %p285, %s25, 1
        %p287 = scmp.lt.s32.totalorder %s284, 1
        %s288 = scalar_select %p287, %s284, 1
        %s289 = smul.addr %s286, 2
        %s290 = sadd.s32 %s288, %s289
        %s291 = smul.addr %s290, 4
        %s292 = scalar_lea.vmem %s0, %s291
        %s293 = smul.u32 2, %s26
        %s294 = smul.u32 2, %s26
        %p295 = scmp.lt.s32.totalorder %s25, 1
        %s296 = scalar_select %p295, %s25, 1
        %p297 = scmp.lt.s32.totalorder %s294, 1
        %s298 = scalar_select %p297, %s294, 1
        %s299 = smul.addr %s296, 2
        %s300 = sadd.s32 %s298, %s299
        %s301 = smul.addr %s300, 4
        %s302 = scalar_lea.vmem %s5, %s301
        %s303 = smul.u32 2, %s26
        %s304 = smul.u32 2, %s26
        %v305 = vld [vmem:[%s292] sm:$0x77]
        %v306 = vld [vmem:[%s3] sm:$0x7]
        %308 = vset.pattern.permute.xlu0 0
        %309 = vperm.xlu0 %308, %v306
        %v310 = vpop.permute.xlu0 %309
        %v312 = vunpack.c.l.s4 839922192
        %v313 = vunpack.c.0.s8 %v312
        %v314 = vlaneseq
        %v315 = vshrl.u32 %v314, 7
        %v316 = vsub.s32 %v313, %v315
        %v317 = vrot.slane %v310, %v316
        %v319 = vmul.f32 %v305, %v317
        %v320 = vld [vmem:[%s4] sm:$0x7]
        %322 = vset.pattern.permute.xlu0 0
        %323 = vperm.xlu0 %322, %v320
        %v324 = vpop.permute.xlu0 %323
        %v326 = vunpack.c.l.s4 839922192
        %v327 = vunpack.c.0.s8 %v326
        %v328 = vlaneseq
        %v329 = vshrl.u32 %v328, 7
        %v330 = vsub.s32 %v327, %v329
        %v331 = vrot.slane %v324, %v330
        %v333 = vsub.f32 %v319, %v331
        %334 = vst [vmem:[%s302] sm:$0x77] %v333
        %v335 = vld [vmem:[%s1] sm:$0xff]
        %v336 = vld [vmem:[%s2] sm:$0xff]
        %338 = vset.pattern.permute.xlu0 0
        %339 = vperm.xlu0 %338, %v336
        %v340 = vpop.permute.xlu0 %339
        %v343 = vcombine.high %v333, %v333
        %vm344 = vcmask 23552
        %v346 = vsel %vm344, %v335, 0
        %vm348 = vcmask 1042432
        %v349 = vsel %vm348, %v333, 0
        %v351 = vsel %vm348, %v343, 0
        %353 = vmatprep.subr.mxu0 %v351
        %354 = vmatpush1.msra.mxu0 %v349
        %355 = vmatprep.subr.mxu0 0.0
        %356 = vmatpush1.msra.mxu0 0.0
        %357 = vmatprep.subr.mxu0 0.0
        %358 = vmatpush1.msra.mxu0 0.0
        %359 = vmatprep.subr.mxu0 0.0
        %360 = vmatpush1.msra.mxu0 0.0
        %361 = vmatprep.subr.mxu0 0.0
        %362 = vmatpush1.msra.mxu0 0.0
        %363 = vmatprep.subr.mxu0 0.0
        %364 = vmatpush1.msra.mxu0 0.0
        %365 = vmatprep.subr.mxu0 0.0
        %366 = vmatpush1.msra.mxu0 0.0
        %367 = vmatprep.subr.mxu0 0.0
        %368 = vmatpush1.msra.mxu0 0.0
        %369 = vmatprep.subr.mxu0 0.0
        %370 = vmatpush1.msra.mxu0 0.0
        %371 = vmatprep.subr.mxu0 0.0
        %372 = vmatpush1.msra.mxu0 0.0
        %373 = vmatprep.subr.mxu0 0.0
        %374 = vmatpush1.msra.mxu0 0.0
        %375 = vmatprep.subr.mxu0 0.0
        %376 = vmatpush1.msra.mxu0 0.0
        %377 = vmatprep.subr.mxu0 0.0
        %378 = vmatpush1.msra.mxu0 0.0
        %379 = vmatprep.subr.mxu0 0.0
        %380 = vmatpush1.msra.mxu0 0.0
        %381 = vmatprep.subr.mxu0 0.0
        %382 = vmatpush1.msra.mxu0 0.0
        %383 = vmatprep.subr.mxu0 0.0
        %384 = vmatpush1.msra.mxu0 0.0
        %385 = vmatprep.subr.mxu0 0.0
        %386 = vmatpush1.msra.mxu0 0.0
        %387 = vmatprep.subr.mxu0 0.0
        %388 = vmatpush1.msra.mxu0 0.0
        %389 = vmatprep.subr.mxu0 0.0
        %390 = vmatpush1.msra.mxu0 0.0
        %391 = vmatprep.subr.mxu0 0.0
        %392 = vmatpush1.msra.mxu0 0.0
        %393 = vmatprep.subr.mxu0 0.0
        %394 = vmatpush1.msra.mxu0 0.0
        %395 = vmatprep.subr.mxu0 0.0
        %396 = vmatpush1.msra.mxu0 0.0
        %397 = vmatprep.subr.mxu0 0.0
        %398 = vmatpush1.msra.mxu0 0.0
        %399 = vmatprep.subr.mxu0 0.0
        %400 = vmatpush1.msra.mxu0 0.0
        %401 = vmatprep.subr.mxu0 0.0
        %402 = vmatpush1.msra.mxu0 0.0
        %403 = vmatprep.subr.mxu0 0.0
        %404 = vmatpush1.msra.mxu0 0.0
        %405 = vmatprep.subr.mxu0 0.0
        %406 = vmatpush1.msra.mxu0 0.0
        %407 = vmatprep.subr.mxu0 0.0
        %408 = vmatpush1.msra.mxu0 0.0
        %409 = vmatprep.subr.mxu0 0.0
        %410 = vmatpush1.msra.mxu0 0.0
        %411 = vmatprep.subr.mxu0 0.0
        %412 = vmatpush1.msra.mxu0 0.0
        %413 = vmatprep.subr.mxu0 0.0
        %414 = vmatpush1.msra.mxu0 0.0
        %415 = vmatprep.subr.mxu0 0.0
        %416 = vmatpush1.msra.mxu0 0.0
        %417 = vmatprep.mubr.f32.mxu0 0.0
        %418 = vmatmul.mubr.f32.gmra.mrb[0].mxu0 %v346
        %v419 = vpop.f32.mrb[0].mxu0
        %v420 = vadd.f32 %v340, %v419
        %v421 = vpop.f32.mrb[0].mxu0
        %v422 = vadd.f32 %v340, %v421
        %423 = vdwg.mxu0
        %v424 = vmax.f32 %v420, 0.0
        %v425 = vmax.f32 %v422, 0.0
        %426 = vst [vmem:[%s283] sm:$0xff] %v424
        %427 = vst [vmem:[%s283 + $0x8] sm:$0xff] %v425
        %s428 = smul.u32 2, %s26
        %p429 = scmp.lt.s32.totalorder %s25, 1
        %s430 = scalar_select %p429, %s25, 1
        %p431 = scmp.lt.s32.totalorder %s428, 1
        %s432 = scalar_select %p431, %s428, 1
        %s433 = smul.addr %s430, 2
        %s434 = sadd.s32 %s432, %s433
        %s435 = smul.addr %s434, 4
        %s436 = scalar_lea.vmem %s5, %s435
        %s437 = sand.u32 %s183, 1
        %s438 = scalar_lea.sflag [#allocation3], %s437
        %s439 = sand.u32 %s183, 1
        %s440 = smul.addr %s439, 16
        %s441 = scalar_lea.vmem [#allocation2], %s440
        // Predicated region
        $region41: #{tpu_custom_call.1} parent=39 // pred_check
          %p442 = pneg %p165
        $region42: #{tpu_custom_call.1} parent=39 // pred_check_branch
          %444 = sbr.rel (%p442) target = $region44
        $region43: #{tpu_custom_call.1} parent=39 // pred_region
          %s445 = smul.u32 2, %s26
        $region44: #{tpu_custom_call.1} parent=39 // pred_fallthru
          _
        // Predicated region
        $region45: #{tpu_custom_call.1} parent=39 // pred_check
          %p446 = pneg %p193
        $region46: #{tpu_custom_call.1} parent=39 // pred_check_branch
          %448 = sbr.rel (%p446) target = $region48
        $region47: #{tpu_custom_call.1} parent=39 // pred_region
          %s449 = smul.u32 2, %s26
          %s451 = ssub.s32 256, 256
          %452 = vsyncadd %s438, %s451
          %s453 = smul.addr %s25, 2
          %s454 = sadd.s32 %s449, %s453
          %s455 = smul.addr %s454, 128
          %s456 = scalar_lea.hbm %s6, %s455
          %s458 = sshll.u32 %s441, 4
          %s459 = int_to_ptr.vmem [resolvable:$true] %s458
          %461 = dma.vmem_to_hbm [thread:$0]  %s459, 256, %s456, %s438
        $region48: #{tpu_custom_call.1} parent=39 // pred_fallthru
          _
      $region40: #{tpu_custom_call.1} parent=5 // pred_fallthru
        _
      %p462 = scmp.le.s32.totalorder 2, %s16
      // Predicated region
      $region49: #{tpu_custom_call.1} parent=5 // pred_check
        %p463 = pneg %p462
      $region50: #{tpu_custom_call.1} parent=5 // pred_check_branch
        %465 = sbr.rel (%p463) target = $region52
      $region51: #{tpu_custom_call.1} parent=5 // pred_region
        %s466 = ssub.s32 %s16, 2
        // Predicated region
        $region53: #{tpu_custom_call.1} parent=51 // pred_check
          %p467 = pneg %p171
        $region54: #{tpu_custom_call.1} parent=51 // pred_check_branch
          %469 = sbr.rel (%p467) target = $region56
        $region55: #{tpu_custom_call.1} parent=51 // pred_region
          %s470 = smul.u32 2, %s28
          %p471 = scmp.lt.s32.totalorder %s27, 1
          %s472 = scalar_select %p471, %s27, 1
          %p473 = scmp.lt.s32.totalorder %s470, 1
          %s474 = scalar_select %p473, %s470, 1
          %s475 = smul.addr %s472, 2
          %s476 = sadd.s32 %s474, %s475
          %s477 = smul.addr %s476, 4
          %s478 = scalar_lea.vmem %s5, %s477
        $region56: #{tpu_custom_call.1} parent=51 // pred_fallthru
          _
        // Predicated region
        $region57: #{tpu_custom_call.1} parent=51 // pred_check
          %p479 = pneg %p199
        $region58: #{tpu_custom_call.1} parent=51 // pred_check_branch
          %481 = sbr.rel (%p479) target = $region60
        $region59: #{tpu_custom_call.1} parent=51 // pred_region
          %s482 = sand.u32 %s184, 1
          %s483 = scalar_lea.sflag [#allocation3], %s482
          %s484 = sand.u32 %s184, 1
          %s485 = smul.addr %s484, 16
          %s486 = scalar_lea.vmem [#allocation2], %s485
          %487 = dma.done %s483, 256
        $region60: #{tpu_custom_call.1} parent=51 // pred_fallthru
          _
      $region52: #{tpu_custom_call.1} parent=5 // pred_fallthru
        _
    $region6: #{tpu_custom_call.1} parent=1 // loop_footer
      %s20 = sadd.s32 1, %s16
    $region7: #{tpu_custom_call.1} parent=1 // loop_footer_branch
      %15 = sbr.rel target = $region3
    $region8: #{tpu_custom_call.1} parent=1 // loop_exit
      _
    %488 = vsyncpa [#allocation3], 1
    %s489 = scalar_lea.sflag [#allocation3], 1
    %490 = vsyncpa %s489, 1

</llo_original>
